<compile_context>
chip_gen: v7x
topology: tpu7x:2x2x1
jax: 0.10.0
libtpu: 0.0.40
codegen_flags: <defaults>
</compile_context>

<pallas_src>
import functools
import math

import jax
import jax.numpy as jnp
from jax.experimental import pallas as pl
from jax.experimental.pallas import tpu as pltpu

# ----------------------------- problem sizes -----------------------------
B = 2            # batch
L = 8            # number of events per sequence
LP1 = L + 1      # + prepended window event
MARKS = 4        # number of mark classes
EMB = 16         # per-component embedding size
EH = EMB // 2    # half (sin / cos split)
D = 2 * EMB      # output_size of the encoder representation

_NEG_LOG_FREQ_SCALE = -2.0 * math.log(10000.0) / EMB   # freqs[k] = exp(-2k ln(1e4)/EMB)


# ----------------------------- Pallas kernel -----------------------------
def _encoder_kernel(times_ref, seqmask_ref, labels_ref, w_ref, rep_ref, mask_ref):
    """Whole batch in one kernel invocation.

    times_ref   : [B, L]        f32 raw event times (no window prepended)
    seqmask_ref : [B, L]        f32 event validity mask
    labels_ref  : [B, L, MARKS] f32 one-hot/multi-hot labels
    w_ref       : [MARKS, EMB]  f32 label embedding matrix
    rep_ref     : [B, LP1, D]   f32 (out) representations, window row first
    mask_ref    : [B, LP1]      f32 (out) representations mask
    """
    t = times_ref[...]            # [B, L]
    sm = seqmask_ref[...]         # [B, L]
    b = t.shape[0]

    zeros_col = jnp.zeros((b, 1), jnp.float32)
    ones_col = jnp.ones((b, 1), jnp.float32)

    # prev of event 0 is the window start (time 0); prev of event i is t[i-1].
    prev_ev = jnp.concatenate([zeros_col, t[:, :-1]], axis=1)       # [B, L]
    delta_ev = t - prev_ev                                          # relative times of events

    # representations_mask = histories_mask * pos_delta_mask
    #   window row: always valid (allow_window); event rows: valid iff delta > 0 and real event.
    mask_ev = sm * (delta_ev > 0.0).astype(jnp.float32)             # [B, L]
    mask_ref[...] = jnp.concatenate([ones_col, mask_ev], axis=1)    # [B, LP1]

    # Full relative-time vector including the window row (delta of window = 0).
    delta = jnp.concatenate([zeros_col, delta_ev], axis=1)          # [B, LP1]

    # Sinusoidal frequencies generated in-kernel (compile-time pattern; EUP exp).
    k = jax.lax.broadcasted_iota(jnp.int32, (1, 1, EH), 2).astype(jnp.float32)
    freqs = jnp.exp(k * _NEG_LOG_FREQ_SCALE)                        # [1, 1, EH]

    phase = delta[:, :, None] * freqs                               # [B, LP1, EH]
    sin_part = jnp.sin(phase)
    cos_part = jnp.cos(phase)

    # Label embedding on the VPU: sum over mark columns of labels[..., m] * W[m].
    w = w_ref[...]                                                  # [MARKS, EMB]
    lab = labels_ref[...]                                           # [B, L, MARKS]
    emb_ev = lab[:, :, 0:1] * w[0:1, :][None, :, :]                 # [B, L, EMB]
    for m in range(1, MARKS):
        emb_ev = emb_ev + lab[:, :, m:m + 1] * w[m:m + 1, :][None, :, :]
    # Window row embedding is zero (th.cat(zeros, labels) in the original module).
    emb = jnp.concatenate([jnp.zeros((b, 1, EMB), jnp.float32), emb_ev], axis=1)  # [B, LP1, EMB]

    # Single fused full-block store of the representation.
    rep_ref[...] = jnp.concatenate([sin_part, cos_part, emb], axis=-1)


# ----------------------------- wrapper -----------------------------
@functools.partial(jax.jit, static_argnames=())
def encoder_representations(times, labels, seq_mask, emb_w):
    """times: [B, L] f32, labels: [B, L, MARKS] f32, seq_mask: [B, L] f32.

    Returns (representations [B, L+1, D], representations_mask [B, L+1]).
    """
    b, l = times.shape

    rep, mask = pl.pallas_call(
        _encoder_kernel,
        out_shape=(
            jax.ShapeDtypeStruct((b, l + 1, D), jnp.float32),
            jax.ShapeDtypeStruct((b, l + 1), jnp.float32),
        ),
        grid_spec=pltpu.PrefetchScalarGridSpec(
            num_scalar_prefetch=0,
            grid=(1,),                                      # single step: whole batch per step
            in_specs=[
                pl.BlockSpec((b, l), lambda i: (0, 0)),               # times
                pl.BlockSpec((b, l), lambda i: (0, 0)),               # sequence mask
                pl.BlockSpec((b, l, MARKS), lambda i: (0, 0, 0)),     # labels
                pl.BlockSpec((MARKS, EMB), lambda i: (0, 0)),         # embedding weight
            ],
            out_specs=[
                pl.BlockSpec((b, l + 1, D), lambda i: (0, 0, 0)),     # representations
                pl.BlockSpec((b, l + 1), lambda i: (0, 0)),           # representations mask
            ],
        ),
        compiler_params=pltpu.CompilerParams(dimension_semantics=("arbitrary",)),
    )(times, seq_mask, labels, emb_w)
    return rep, mask


# ----------------------------- pure-JAX reference -----------------------------
def _reference(times, labels, seq_mask, emb_w):
    b = times.shape[0]
    zeros1 = jnp.zeros((b, 1), jnp.float32)
    times_p = jnp.concatenate([zeros1, times], axis=1)
    hist_mask = jnp.concatenate([jnp.ones((b, 1), jnp.float32), seq_mask], axis=1)
    prev_times = jnp.concatenate([times_p[:, 0:1], times_p[:, :-1]], axis=1)
    delta = times_p - prev_times
    pos_delta_mask = jnp.concatenate(
        [jnp.ones((b, 1), jnp.float32), (delta[:, 1:] > 0).astype(jnp.float32)], axis=1)
    labels_p = jnp.concatenate(
        [jnp.zeros((b, 1, MARKS), jnp.float32), labels], axis=1)

    freqs = 1.0 / (10000.0 ** (2.0 * jnp.arange(EH, dtype=jnp.float32) / EMB))   # [EH]
    phase = delta[..., None] * freqs[None, None, :]
    temporal = jnp.concatenate([jnp.sin(phase), jnp.cos(phase)], axis=-1)
    emb = labels_p @ emb_w
    rep = jnp.concatenate([temporal, emb], axis=-1)
    mask = hist_mask * pos_delta_mask
    return rep, mask


# ----------------------------- main -----------------------------
if __name__ == "__main__":
    key = jax.random.PRNGKey(0)
    k_t, k_l, k_w = jax.random.split(key, 3)

    # Strictly increasing event times per sequence.
    gaps = jax.random.uniform(k_t, (B, L), minval=0.1, maxval=1.0, dtype=jnp.float32)
    times = jnp.cumsum(gaps, axis=1)                                     # [B, L]

    # One-hot mark labels.
    label_ids = jax.random.randint(k_l, (B, L), 0, MARKS)
    labels_onehot = jax.nn.one_hot(label_ids, MARKS, dtype=jnp.float32)  # [B, L, MARKS]

    # All events are real (no padding) in this small example.
    seq_mask = jnp.ones((B, L), jnp.float32)

    # Deterministic parameter init (synthetic; no checkpoint load).
    emb_w = jax.random.normal(k_w, (MARKS, EMB), dtype=jnp.float32) * 0.1

    rep, mask = encoder_representations(times, labels_onehot, seq_mask, emb_w)
    rep = jax.block_until_ready(rep)
    mask = jax.block_until_ready(mask)

    rep_ref, mask_ref = _reference(times, labels_onehot, seq_mask, emb_w)
    assert rep.shape == (B, LP1, D) and mask.shape == (B, LP1)
    assert jnp.allclose(rep, rep_ref, atol=1e-5, rtol=1e-5)
    assert jnp.allclose(mask, mask_ref, atol=1e-6)

    print("KERNEL_OK")
</pallas_src>

<mosaic_0001>
module attributes {stable_mosaic.version = 11 : i64} {
  func.func @_encoder_kernel(%arg0: i32, %arg1: memref<2x8xf32, #tpu.memory_space<vmem>>, %arg2: memref<2x8xf32, #tpu.memory_space<vmem>>, %arg3: memref<2x8x4xf32, #tpu.memory_space<vmem>>, %arg4: memref<4x16xf32, #tpu.memory_space<vmem>>, %arg5: memref<2x9x32xf32, #tpu.memory_space<vmem>>, %arg6: memref<2x9xf32, #tpu.memory_space<vmem>>) attributes {dimension_semantics = [#tpu.dimension_semantics<arbitrary>], iteration_bounds = array<i64: 1>, scalar_prefetch = 0 : i64, scratch_operands = 0 : i64, tpu.core_type = #tpu.core_type<tc>, window_params = [{pipeline_mode = #tpu.pipeline_mode<synchronous>, transform_indices = @transform_0, window_bounds = array<i64: 2, 8>}, {pipeline_mode = #tpu.pipeline_mode<synchronous>, transform_indices = @transform_1, window_bounds = array<i64: 2, 8>}, {pipeline_mode = #tpu.pipeline_mode<synchronous>, transform_indices = @transform_2, window_bounds = array<i64: 2, 8, 4>}, {pipeline_mode = #tpu.pipeline_mode<synchronous>, transform_indices = @transform_3, window_bounds = array<i64: 4, 16>}, {pipeline_mode = #tpu.pipeline_mode<synchronous>, transform_indices = @transform_4, window_bounds = array<i64: 2, 9, 32>}, {pipeline_mode = #tpu.pipeline_mode<synchronous>, transform_indices = @transform_5, window_bounds = array<i64: 2, 9>}]} {
    %c0 = arith.constant 0 : index
    %c0_0 = arith.constant 0 : index
    %0 = vector.load %arg1[%c0, %c0_0] : memref<2x8xf32, #tpu.memory_space<vmem>>, vector<2x8xf32>
    %c0_1 = arith.constant 0 : index
    %c0_2 = arith.constant 0 : index
    %1 = vector.load %arg2[%c0_1, %c0_2] : memref<2x8xf32, #tpu.memory_space<vmem>>, vector<2x8xf32>
    %cst = arith.constant 0.000000e+00 : f32
    %2 = vector.broadcast %cst : f32 to vector<2x1xf32>
    %cst_3 = arith.constant 1.000000e+00 : f32
    %3 = vector.broadcast %cst_3 : f32 to vector<2x1xf32>
    %4 = vector.extract_strided_slice %0 {offsets = [0, 0], sizes = [2, 7], strides = [1, 1]} : vector<2x8xf32> to vector<2x7xf32>
    %5 = tpu.concatenate %2, %4 in 1 : vector<2x1xf32>, vector<2x7xf32> -> vector<2x8xf32>
    %6 = arith.subf %0, %5 : vector<2x8xf32>
    %cst_4 = arith.constant 0.000000e+00 : f32
    %7 = vector.broadcast %cst_4 : f32 to vector<2x8xf32>
    %8 = arith.cmpf ogt, %6, %7 : vector<2x8xf32>
    %9 = arith.extui %8 : vector<2x8xi1> to vector<2x8xi32>
    %10 = arith.sitofp %9 : vector<2x8xi32> to vector<2x8xf32>
    %11 = arith.mulf %1, %10 : vector<2x8xf32>
    %12 = tpu.concatenate %3, %11 in 1 : vector<2x1xf32>, vector<2x8xf32> -> vector<2x9xf32>
    %c0_5 = arith.constant 0 : index
    %c0_6 = arith.constant 0 : index
    %13 = vector.load %arg6[%c0_5, %c0_6] : memref<2x9xf32, #tpu.memory_space<vmem>>, vector<2x9xf32>
    tpu.vector_store %arg6[%c0_5, %c0_6], %12 {strides = array<i32>} : memref<2x9xf32, #tpu.memory_space<vmem>>, vector<2x9xf32>,
    %14 = tpu.concatenate %2, %6 in 1 : vector<2x1xf32>, vector<2x8xf32> -> vector<2x9xf32>
    %15 = tpu.iota {dimensions = array<i32: 2>} : vector<1x1x8xi32>
    %16 = arith.sitofp %15 : vector<1x1x8xi32> to vector<1x1x8xf32>
    %cst_7 = arith.constant -1.15129256 : f32
    %17 = vector.broadcast %cst_7 : f32 to vector<1x1x8xf32>
    %18 = arith.mulf %16, %17 : vector<1x1x8xf32>
    %19 = math.exp %18 : vector<1x1x8xf32>
    %20 = vector.shape_cast %14 : vector<2x9xf32> to vector<2x9x1xf32>
    %21 = vector.broadcast %20 : vector<2x9x1xf32> to vector<2x9x8xf32>
    %22 = vector.broadcast %19 : vector<1x1x8xf32> to vector<2x9x8xf32>
    %23 = arith.mulf %21, %22 : vector<2x9x8xf32>
    %24 = math.sin %23 : vector<2x9x8xf32>
    %25 = math.cos %23 : vector<2x9x8xf32>
    %c0_8 = arith.constant 0 : index
    %c0_9 = arith.constant 0 : index
    %26 = vector.load %arg4[%c0_8, %c0_9] : memref<4x16xf32, #tpu.memory_space<vmem>>, vector<4x16xf32>
    %c0_10 = arith.constant 0 : index
    %c0_11 = arith.constant 0 : index
    %c0_12 = arith.constant 0 : index
    %27 = vector.load %arg3[%c0_10, %c0_11, %c0_12] : memref<2x8x4xf32, #tpu.memory_space<vmem>>, vector<2x8x4xf32>
    %28 = vector.extract_strided_slice %27 {offsets = [0, 0, 0], sizes = [2, 8, 1], strides = [1, 1, 1]} : vector<2x8x4xf32> to vector<2x8x1xf32>
    %29 = vector.extract_strided_slice %26 {offsets = [0, 0], sizes = [1, 16], strides = [1, 1]} : vector<4x16xf32> to vector<1x16xf32>
    %30 = vector.shape_cast %29 : vector<1x16xf32> to vector<1x1x16xf32>
    %31 = vector.broadcast %28 : vector<2x8x1xf32> to vector<2x8x16xf32>
    %32 = vector.broadcast %30 : vector<1x1x16xf32> to vector<2x8x16xf32>
    %33 = arith.mulf %31, %32 : vector<2x8x16xf32>
    %34 = vector.extract_strided_slice %27 {offsets = [0, 0, 1], sizes = [2, 8, 1], strides = [1, 1, 1]} : vector<2x8x4xf32> to vector<2x8x1xf32>
    %35 = vector.extract_strided_slice %26 {offsets = [1, 0], sizes = [1, 16], strides = [1, 1]} : vector<4x16xf32> to vector<1x16xf32>
    %36 = vector.shape_cast %35 : vector<1x16xf32> to vector<1x1x16xf32>
    %37 = vector.broadcast %34 : vector<2x8x1xf32> to vector<2x8x16xf32>
    %38 = vector.broadcast %36 : vector<1x1x16xf32> to vector<2x8x16xf32>
    %39 = arith.mulf %37, %38 : vector<2x8x16xf32>
    %40 = arith.addf %33, %39 : vector<2x8x16xf32>
    %41 = vector.extract_strided_slice %27 {offsets = [0, 0, 2], sizes = [2, 8, 1], strides = [1, 1, 1]} : vector<2x8x4xf32> to vector<2x8x1xf32>
    %42 = vector.extract_strided_slice %26 {offsets = [2, 0], sizes = [1, 16], strides = [1, 1]} : vector<4x16xf32> to vector<1x16xf32>
    %43 = vector.shape_cast %42 : vector<1x16xf32> to vector<1x1x16xf32>
    %44 = vector.broadcast %41 : vector<2x8x1xf32> to vector<2x8x16xf32>
    %45 = vector.broadcast %43 : vector<1x1x16xf32> to vector<2x8x16xf32>
    %46 = arith.mulf %44, %45 : vector<2x8x16xf32>
    %47 = arith.addf %40, %46 : vector<2x8x16xf32>
    %48 = vector.extract_strided_slice %27 {offsets = [0, 0, 3], sizes = [2, 8, 1], strides = [1, 1, 1]} : vector<2x8x4xf32> to vector<2x8x1xf32>
    %49 = vector.extract_strided_slice %26 {offsets = [3, 0], sizes = [1, 16], strides = [1, 1]} : vector<4x16xf32> to vector<1x16xf32>
    %50 = vector.shape_cast %49 : vector<1x16xf32> to vector<1x1x16xf32>
    %51 = vector.broadcast %48 : vector<2x8x1xf32> to vector<2x8x16xf32>
    %52 = vector.broadcast %50 : vector<1x1x16xf32> to vector<2x8x16xf32>
    %53 = arith.mulf %51, %52 : vector<2x8x16xf32>
    %54 = arith.addf %47, %53 : vector<2x8x16xf32>
    %cst_13 = arith.constant 0.000000e+00 : f32
    %55 = vector.broadcast %cst_13 : f32 to vector<2x1x16xf32>
    %56 = tpu.concatenate %55, %54 in 1 : vector<2x1x16xf32>, vector<2x8x16xf32> -> vector<2x9x16xf32>
    %57 = tpu.concatenate %24, %25, %56 in 2 : vector<2x9x8xf32>, vector<2x9x8xf32>, vector<2x9x16xf32> -> vector<2x9x32xf32>
    %c0_14 = arith.constant 0 : index
    %c0_15 = arith.constant 0 : index
    %c0_16 = arith.constant 0 : index
    %58 = vector.load %arg5[%c0_14, %c0_15, %c0_16] : memref<2x9x32xf32, #tpu.memory_space<vmem>>, vector<2x9x32xf32>
    tpu.vector_store %arg5[%c0_14, %c0_15, %c0_16], %57 {strides = array<i32>} : memref<2x9x32xf32, #tpu.memory_space<vmem>>, vector<2x9x32xf32>,
    return
  }
  func.func @transform_0(%arg0: i32) -> (i32, i32) {
    %c0_i32 = arith.constant 0 : i32
    %c0_i32_0 = arith.constant 0 : i32
    %c0_i32_1 = arith.constant 0 : i32
    return %c0_i32, %c0_i32_0 : i32, i32
  }
  func.func @transform_1(%arg0: i32) -> (i32, i32) {
    %c0_i32 = arith.constant 0 : i32
    %c0_i32_0 = arith.constant 0 : i32
    %c0_i32_1 = arith.constant 0 : i32
    return %c0_i32, %c0_i32_0 : i32, i32
  }
  func.func @transform_2(%arg0: i32) -> (i32, i32, i32) {
    %c0_i32 = arith.constant 0 : i32
    %c0_i32_0 = arith.constant 0 : i32
    %c0_i32_1 = arith.constant 0 : i32
    %c0_i32_2 = arith.constant 0 : i32
    return %c0_i32, %c0_i32_0, %c0_i32_1 : i32, i32, i32
  }
  func.func @transform_3(%arg0: i32) -> (i32, i32) {
    %c0_i32 = arith.constant 0 : i32
    %c0_i32_0 = arith.constant 0 : i32
    %c0_i32_1 = arith.constant 0 : i32
    return %c0_i32, %c0_i32_0 : i32, i32
  }
  func.func @transform_4(%arg0: i32) -> (i32, i32, i32) {
    %c0_i32 = arith.constant 0 : i32
    %c0_i32_0 = arith.constant 0 : i32
    %c0_i32_1 = arith.constant 0 : i32
    %c0_i32_2 = arith.constant 0 : i32
    return %c0_i32, %c0_i32_0, %c0_i32_1 : i32, i32, i32
  }
  func.func @transform_5(%arg0: i32) -> (i32, i32) {
    %c0_i32 = arith.constant 0 : i32
    %c0_i32_0 = arith.constant 0 : i32
    %c0_i32_1 = arith.constant 0 : i32
    return %c0_i32, %c0_i32_0 : i32, i32
  }
}

</mosaic_0001>

<llo_original>
// kernel: encoder_representations.1
$region0: #{encoder_representations.1}
  #allocation0 [shape = 'u32[]', space=smem, size = 0x4, offset = 0x4, fixed_abs, tag = 'smem constant byte address 0x4 - core index']
  #allocation1 [shape = 'u32[144,128]{1,0:T(1,128)}', space=vmem, size = 0x12000, scoped, tag = 'internal scratch']
  %s0 = inlined_call_operand.vmem [shape: f32[2,8], index: 0, kind: input, shape index: {}]
  %s1 = inlined_call_operand.vmem [shape: f32[2,8], index: 1, kind: input, shape index: {}]
  %s2 = inlined_call_operand.vmem [shape: f32[2,8,4], index: 2, kind: input, shape index: {}]
  %s3 = inlined_call_operand.vmem [shape: f32[4,16], index: 3, kind: input, shape index: {}]
  %s4 = inlined_call_operand.vmem [shape: f32[2,9,32], index: 4, kind: output, shape index: {0}]
  %s5 = inlined_call_operand.hbm [shape: f32[2,9], index: 5, kind: output, shape index: {1}]
  %6 = xla_tuple %s4, %s5
  %s7 = sld [smem:[#allocation0]]
  $region34: #{encoder_representations.1} parent=0
    _
  %s9 = ssub.s32 1, %s7
  %s10 = scalar_select 0, %s9, %s7
  $region1: #{encoder_representations.1} parent=0
    #allocation2 [shape = 'u8[1024]{0}', space=vmem, size = 0x400, scoped, tag = 'output window, operand 1, single buffered']
    #allocation3 [shape = 's32[1]{0}', space=sflag, size = 0x4, scoped, tag = 'scoped memory for encoder_representations.1']
    %11 = vsyncpa [#allocation3], 0
    // Predicated region
    $region2: #{encoder_representations.1} parent=1 // pred_check
      _
    $region3: #{encoder_representations.1} parent=1 // pred_check_branch
      %13 = sbr.rel (0) target = $region5
    $region4: #{encoder_representations.1} parent=1 // pred_region
      _
    $region5: #{encoder_representations.1} parent=1 // pred_fallthru
      _
    // Predicated region
    $region6: #{encoder_representations.1} parent=1 // pred_check
      _
    $region7: #{encoder_representations.1} parent=1 // pred_check_branch
      %15 = sbr.rel (0) target = $region9
    $region8: #{encoder_representations.1} parent=1 // pred_region
      _
    $region9: #{encoder_representations.1} parent=1 // pred_fallthru
      _
    // Predicated region
    $region10: #{encoder_representations.1} parent=1 // pred_check
      _
    $region11: #{encoder_representations.1} parent=1 // pred_check_branch
      %17 = sbr.rel (0) target = $region13
    $region12: #{encoder_representations.1} parent=1 // pred_region
      _
    $region13: #{encoder_representations.1} parent=1 // pred_fallthru
      _
    // Predicated region
    $region14: #{encoder_representations.1} parent=1 // pred_check
      _
    $region15: #{encoder_representations.1} parent=1 // pred_check_branch
      %19 = sbr.rel (0) target = $region17
    $region16: #{encoder_representations.1} parent=1 // pred_region
      _
    $region17: #{encoder_representations.1} parent=1 // pred_fallthru
      _
    %v20 = vld [vmem:[%s0] sm:$0x3]
    %v21 = vld [vmem:[%s1] sm:$0x3]
    %23 = vrot.lane.b32.xlu0 %v20, 1
    %v24 = vpop.permute.xlu0 %23
    %vm26 = vcmask 7168
    %v27 = vsel %vm26, 0.0, %v24
    %v28 = vsub.f32 %v20, %v27
    %vm29 = vcmp.gt.f32.partialorder %v28, 0.0
    %v30 = vsel %vm29, 1, 0
    %v31 = vcvt.s32.f32 %v30
    %v32 = vmul.f32 %v21, %v31
    %34 = vrot.lane.b32.xlu0 %v32, 1
    %v35 = vpop.permute.xlu0 %34
    %v37 = vsel %vm26, 1.0, %v35
    %vm38 = vcmask 66560
    %39 = vst.msk [vmem:[#allocation2] sm:$0x3] %vm38, %v37
    %41 = vrot.lane.b32.xlu0 %v28, 1
    %v42 = vpop.permute.xlu0 %41
    %v44 = vsel %vm26, 0.0, %v42
    %v45 = vlaneseq
    %v46 = vand.u32 %v45, 127
    %v47 = vcvt.s32.f32 %v46
    %v48 = vmul.f32 %v47, -1.1512926
    %v49 = vmul.f32 %v48, 1.442695
    %v50 = vpow.pop %v49
    %v51 = vlaneseq
    %v52 = vshrl.u32 %v51, 7
    %v53 = vsub.s32 0, %v52
    %v54 = vrot.slane %v44, %v53
    %56 = vbcast.lane.b32.xlu0 %v54, 256
    %v57 = vpop.permute.xlu0 %56
    %s59 = sor.u32 256, 8
    %60 = vbcast.lane.b32.xlu0 %v54, %s59
    %v61 = vpop.permute.xlu0 %60
    %v62 = vlaneseq
    %v63 = vshrl.u32 %v62, 7
    %v64 = vsub.s32 1, %v63
    %v65 = vrot.slane %v44, %v64
    %67 = vbcast.lane.b32.xlu0 %v65, 256
    %v68 = vpop.permute.xlu0 %67
    %s70 = sor.u32 256, 8
    %71 = vbcast.lane.b32.xlu0 %v65, %s70
    %v72 = vpop.permute.xlu0 %71
    %v73 = vmul.f32 %v57, %v50
    %v74 = vmul.f32 %v61, %v50
    %v75 = vmul.f32 %v68, %v50
    %v76 = vmul.f32 %v72, %v50
    %v77 = vand.u32 2147483647, %v73
    %vm78 = vcmp.le.f32.partialorder %v77, 0.7853982
    %vm79 = vcmp.lt.s32.totalorder %v73, 0
    %v80 = vand.u32 %v73, 2139095040
    %v81 = vshrl.u32 %v80, 23
    %v82 = vsub.s32 %v81, 127
    %v83 = vand.u32 2147483647, %v73
    %v84 = vand.u32 %v83, 8388607
    %v85 = vor.u32 %v84, 8388608
    %v86 = vsub.s32 0, %v85
    %v87 = vadd.s32 %v82, 1
    %vm88 = vcmp.gt.s32.totalorder %v87, 0
    %v89 = vsel %vm88, %v87, 0
    %v90 = vshrl.u32 %v89, 5
    %v91 = vand.u32 %v89, 31
    %v92 = vsub.s32 32, %v91
    %v93 = vshrl.u32 683565275, %v92
    %v94 = vshll.u32 683565275, %v91
    %v95 = vshrl.u32 2475754826, %v92
    %v96 = vor.u32 %v94, %v95
    %v97 = vshll.u32 2475754826, %v91
    %v98 = vshrl.u32 2131351028, %v92
    %v99 = vor.u32 %v97, %v98
    %v100 = vshll.u32 2131351028, %v91
    %v101 = vshrl.u32 2102212464, %v92
    %v102 = vor.u32 %v100, %v101
    %v103 = vshll.u32 2102212464, %v91
    %v104 = vshrl.u32 920167782, %v92
    %v105 = vor.u32 %v103, %v104
    %v106 = vshll.u32 920167782, %v91
    %v107 = vshrl.u32 1326507024, %v92
    %v108 = vor.u32 %v106, %v107
    %vm109 = vcmp.lt.s32.totalorder %v90, 1
    %vm110 = vcmp.lt.s32.totalorder %v90, 2
    %vm111 = vcmp.lt.s32.totalorder %v90, 3
    %vm112 = vcmp.lt.s32.totalorder %v90, 4
    %v113 = vsel %vm109, %v93, %v96
    %v114 = vsel %vm112, %v102, 2102212464
    %v115 = vsel %vm111, %v99, %v114
    %v116 = vsel %vm110, %v113, %v115
    %v117 = vsel %vm109, %v96, %v99
    %v118 = vsel %vm112, %v105, 920167782
    %v119 = vsel %vm111, %v102, %v118
    %v120 = vsel %vm110, %v117, %v119
    %v121 = vsel %vm109, %v99, %v102
    %v122 = vsel %vm112, %v108, 1326507024
    %v123 = vsel %vm111, %v105, %v122
    %v124 = vsel %vm110, %v121, %v123
    %v125 = vshll.u32 %v85, 8
    %v126 = vmul.u32.u64.compose %v125, %v124
    %v127 = vextract.low.u32 %v126
    %v128 = vextract.high.u32 %v126
    %v129 = vmul.u32.u64.compose %v125, %v120
    %v130 = vextract.low.u32 %v129
    %v131 = vextract.high.u32 %v129
    %v132 = vmul.u32 %v125, %v116
    %v133 = vadd.s32 %v128, %v130
    %vm134 = vc.u32 %v128, %v130
    %v135 = vadd.s32 %v131, 1
    %v136 = vsel %vm134, %v135, %v131
    %v137 = vadd.s32 %v132, %v136
    %v138 = vadd.s32 %v137, 536870912
    %v139 = vshrl.u32 %v138, 30
    %v140 = vshll.u32 %v139, 30
    %v141 = vsub.s32 %v137, %v140
    %vm142 = vcmp.lt.s32.totalorder %v141, 0
    %v143 = vsub.s32 0, %v141
    %v144 = vsel %vm142, %v143, %v141
    %v145 = vclz %v144
    %v146 = vsub.s32 %v145, 2
    %vm147 = vcmp.gt.s32.totalorder 0, %v146
    %v148 = vsel %vm147, 0, %v146
    %v149 = vsub.s32 32, %v148
    %v150 = vshll.u32 %v141, %v148
    %v151 = vshrl.u32 %v133, %v149
    %v152 = vor.u32 %v150, %v151
    %v153 = vsub.s32 4294967266, %v148
    %v154 = vadd.s32 %v153, 127
    %v155 = vshll.u32 %v154, 23
    %v156 = vor.u32 4788187, %v155
    %v157 = vand.u32 2147483647, %v156
    %v159 = vcvt.s32.f32 %v152
    %v160 = vmul.f32 %v159, %v157
    %v161 = vxor.u32 %v160, 2147483648
    %v162 = vsel %vm79, %v161, %v160
    %v163 = vsub.s32 4, %v139
    %v164 = vsel %vm79, %v163, %v139
    %v165 = vsel %vm78, %v73, %v162
    %v166 = vsel %vm78, 0, %v164
    %v167 = vcosq.f32.pop %v165
    %v168 = vsinq.f32.pop %v165
    %vm169 = vweird.f32 %v73
    %v170 = vadd.s32 %v166, 3
    %v171 = vand.u32 %v170, 3
    %vm172 = vcmp.lt.s32.totalorder %v171, 2
    %vm173 = vcmp.eq.s32.totalorder %v171, 0
    %v174 = vxor.u32 %v168, 2147483648
    %v175 = vsel %vm173, %v167, %v174
    %vm176 = vcmp.eq.s32.totalorder %v171, 2
    %v177 = vxor.u32 %v167, 2147483648
    %v178 = vsel %vm176, %v177, %v168
    %v179 = vsel %vm172, %v175, %v178
    %v180 = vsel %vm169, nan, %v179
    %v181 = vand.u32 2147483647, %v74
    %vm182 = vcmp.le.f32.partialorder %v181, 0.7853982
    %vm183 = vcmp.lt.s32.totalorder %v74, 0
    %v184 = vand.u32 %v74, 2139095040
    %v185 = vshrl.u32 %v184, 23
    %v186 = vsub.s32 %v185, 127
    %v187 = vand.u32 2147483647, %v74
    %v188 = vand.u32 %v187, 8388607
    %v189 = vor.u32 %v188, 8388608
    %v190 = vsub.s32 0, %v189
    %v191 = vadd.s32 %v186, 1
    %vm192 = vcmp.gt.s32.totalorder %v191, 0
    %v193 = vsel %vm192, %v191, 0
    %v194 = vshrl.u32 %v193, 5
    %v195 = vand.u32 %v193, 31
    %v196 = vsub.s32 32, %v195
    %v197 = vshrl.u32 683565275, %v196
    %v198 = vshll.u32 683565275, %v195
    %v199 = vshrl.u32 2475754826, %v196
    %v200 = vor.u32 %v198, %v199
    %v201 = vshll.u32 2475754826, %v195
    %v202 = vshrl.u32 2131351028, %v196
    %v203 = vor.u32 %v201, %v202
    %v204 = vshll.u32 2131351028, %v195
    %v205 = vshrl.u32 2102212464, %v196
    %v206 = vor.u32 %v204, %v205
    %v207 = vshll.u32 2102212464, %v195
    %v208 = vshrl.u32 920167782, %v196
    %v209 = vor.u32 %v207, %v208
    %v210 = vshll.u32 920167782, %v195
    %v211 = vshrl.u32 1326507024, %v196
    %v212 = vor.u32 %v210, %v211
    %vm213 = vcmp.lt.s32.totalorder %v194, 1
    %vm214 = vcmp.lt.s32.totalorder %v194, 2
    %vm215 = vcmp.lt.s32.totalorder %v194, 3
    %vm216 = vcmp.lt.s32.totalorder %v194, 4
    %v217 = vsel %vm213, %v197, %v200
    %v218 = vsel %vm216, %v206, 2102212464
    %v219 = vsel %vm215, %v203, %v218
    %v220 = vsel %vm214, %v217, %v219
    %v221 = vsel %vm213, %v200, %v203
    %v222 = vsel %vm216, %v209, 920167782
    %v223 = vsel %vm215, %v206, %v222
    %v224 = vsel %vm214, %v221, %v223
    %v225 = vsel %vm213, %v203, %v206
    %v226 = vsel %vm216, %v212, 1326507024
    %v227 = vsel %vm215, %v209, %v226
    %v228 = vsel %vm214, %v225, %v227
    %v229 = vshll.u32 %v189, 8
    %v230 = vmul.u32.u64.compose %v229, %v228
    %v231 = vextract.low.u32 %v230
    %v232 = vextract.high.u32 %v230
    %v233 = vmul.u32.u64.compose %v229, %v224
    %v234 = vextract.low.u32 %v233
    %v235 = vextract.high.u32 %v233
    %v236 = vmul.u32 %v229, %v220
    %v237 = vadd.s32 %v232, %v234
    %vm238 = vc.u32 %v232, %v234
    %v239 = vadd.s32 %v235, 1
    %v240 = vsel %vm238, %v239, %v235
    %v241 = vadd.s32 %v236, %v240
    %v242 = vadd.s32 %v241, 536870912
    %v243 = vshrl.u32 %v242, 30
    %v244 = vshll.u32 %v243, 30
    %v245 = vsub.s32 %v241, %v244
    %vm246 = vcmp.lt.s32.totalorder %v245, 0
    %v247 = vsub.s32 0, %v245
    %v248 = vsel %vm246, %v247, %v245
    %v249 = vclz %v248
    %v250 = vsub.s32 %v249, 2
    %vm251 = vcmp.gt.s32.totalorder 0, %v250
    %v252 = vsel %vm251, 0, %v250
    %v253 = vsub.s32 32, %v252
    %v254 = vshll.u32 %v245, %v252
    %v255 = vshrl.u32 %v237, %v253
    %v256 = vor.u32 %v254, %v255
    %v257 = vsub.s32 4294967266, %v252
    %v258 = vadd.s32 %v257, 127
    %v259 = vshll.u32 %v258, 23
    %v260 = vor.u32 4788187, %v259
    %v261 = vand.u32 2147483647, %v260
    %v263 = vcvt.s32.f32 %v256
    %v264 = vmul.f32 %v263, %v261
    %v265 = vxor.u32 %v264, 2147483648
    %v266 = vsel %vm183, %v265, %v264
    %v267 = vsub.s32 4, %v243
    %v268 = vsel %vm183, %v267, %v243
    %v269 = vsel %vm182, %v74, %v266
    %v270 = vsel %vm182, 0, %v268
    %v271 = vcosq.f32.pop %v269
    %v272 = vsinq.f32.pop %v269
    %vm273 = vweird.f32 %v74
    %v274 = vadd.s32 %v270, 3
    %v275 = vand.u32 %v274, 3
    %vm276 = vcmp.lt.s32.totalorder %v275, 2
    %vm277 = vcmp.eq.s32.totalorder %v275, 0
    %v278 = vxor.u32 %v272, 2147483648
    %v279 = vsel %vm277, %v271, %v278
    %vm280 = vcmp.eq.s32.totalorder %v275, 2
    %v281 = vxor.u32 %v271, 2147483648
    %v282 = vsel %vm280, %v281, %v272
    %v283 = vsel %vm276, %v279, %v282
    %v284 = vsel %vm273, nan, %v283
    %v285 = vand.u32 2147483647, %v75
    %vm286 = vcmp.le.f32.partialorder %v285, 0.7853982
    %vm287 = vcmp.lt.s32.totalorder %v75, 0
    %v288 = vand.u32 %v75, 2139095040
    %v289 = vshrl.u32 %v288, 23
    %v290 = vsub.s32 %v289, 127
    %v291 = vand.u32 2147483647, %v75
    %v292 = vand.u32 %v291, 8388607
    %v293 = vor.u32 %v292, 8388608
    %v294 = vsub.s32 0, %v293
    %v295 = vadd.s32 %v290, 1
    %vm296 = vcmp.gt.s32.totalorder %v295, 0
    %v297 = vsel %vm296, %v295, 0
    %v298 = vshrl.u32 %v297, 5
    %v299 = vand.u32 %v297, 31
    %v300 = vsub.s32 32, %v299
    %v301 = vshrl.u32 683565275, %v300
    %v302 = vshll.u32 683565275, %v299
    %v303 = vshrl.u32 2475754826, %v300
    %v304 = vor.u32 %v302, %v303
    %v305 = vshll.u32 2475754826, %v299
    %v306 = vshrl.u32 2131351028, %v300
    %v307 = vor.u32 %v305, %v306
    %v308 = vshll.u32 2131351028, %v299
    %v309 = vshrl.u32 2102212464, %v300
    %v310 = vor.u32 %v308, %v309
    %v311 = vshll.u32 2102212464, %v299
    %v312 = vshrl.u32 920167782, %v300
    %v313 = vor.u32 %v311, %v312
    %v314 = vshll.u32 920167782, %v299
    %v315 = vshrl.u32 1326507024, %v300
    %v316 = vor.u32 %v314, %v315
    %vm317 = vcmp.lt.s32.totalorder %v298, 1
    %vm318 = vcmp.lt.s32.totalorder %v298, 2
    %vm319 = vcmp.lt.s32.totalorder %v298, 3
    %vm320 = vcmp.lt.s32.totalorder %v298, 4
    %v321 = vsel %vm317, %v301, %v304
    %v322 = vsel %vm320, %v310, 2102212464
    %v323 = vsel %vm319, %v307, %v322
    %v324 = vsel %vm318, %v321, %v323
    %v325 = vsel %vm317, %v304, %v307
    %v326 = vsel %vm320, %v313, 920167782
    %v327 = vsel %vm319, %v310, %v326
    %v328 = vsel %vm318, %v325, %v327
    %v329 = vsel %vm317, %v307, %v310
    %v330 = vsel %vm320, %v316, 1326507024
    %v331 = vsel %vm319, %v313, %v330
    %v332 = vsel %vm318, %v329, %v331
    %v333 = vshll.u32 %v293, 8
    %v334 = vmul.u32.u64.compose %v333, %v332
    %v335 = vextract.low.u32 %v334
    %v336 = vextract.high.u32 %v334
    %v337 = vmul.u32.u64.compose %v333, %v328
    %v338 = vextract.low.u32 %v337
    %v339 = vextract.high.u32 %v337
    %v340 = vmul.u32 %v333, %v324
    %v341 = vadd.s32 %v336, %v338
    %vm342 = vc.u32 %v336, %v338
    %v343 = vadd.s32 %v339, 1
    %v344 = vsel %vm342, %v343, %v339
    %v345 = vadd.s32 %v340, %v344
    %v346 = vadd.s32 %v345, 536870912
    %v347 = vshrl.u32 %v346, 30
    %v348 = vshll.u32 %v347, 30
    %v349 = vsub.s32 %v345, %v348
    %vm350 = vcmp.lt.s32.totalorder %v349, 0
    %v351 = vsub.s32 0, %v349
    %v352 = vsel %vm350, %v351, %v349
    %v353 = vclz %v352
    %v354 = vsub.s32 %v353, 2
    %vm355 = vcmp.gt.s32.totalorder 0, %v354
    %v356 = vsel %vm355, 0, %v354
    %v357 = vsub.s32 32, %v356
    %v358 = vshll.u32 %v349, %v356
    %v359 = vshrl.u32 %v341, %v357
    %v360 = vor.u32 %v358, %v359
    %v361 = vsub.s32 4294967266, %v356
    %v362 = vadd.s32 %v361, 127
    %v363 = vshll.u32 %v362, 23
    %v364 = vor.u32 4788187, %v363
    %v365 = vand.u32 2147483647, %v364
    %v367 = vcvt.s32.f32 %v360
    %v368 = vmul.f32 %v367, %v365
    %v369 = vxor.u32 %v368, 2147483648
    %v370 = vsel %vm287, %v369, %v368
    %v371 = vsub.s32 4, %v347
    %v372 = vsel %vm287, %v371, %v347
    %v373 = vsel %vm286, %v75, %v370
    %v374 = vsel %vm286, 0, %v372
    %v375 = vcosq.f32.pop %v373
    %v376 = vsinq.f32.pop %v373
    %vm377 = vweird.f32 %v75
    %v378 = vadd.s32 %v374, 3
    %v379 = vand.u32 %v378, 3
    %vm380 = vcmp.lt.s32.totalorder %v379, 2
    %vm381 = vcmp.eq.s32.totalorder %v379, 0
    %v382 = vxor.u32 %v376, 2147483648
    %v383 = vsel %vm381, %v375, %v382
    %vm384 = vcmp.eq.s32.totalorder %v379, 2
    %v385 = vxor.u32 %v375, 2147483648
    %v386 = vsel %vm384, %v385, %v376
    %v387 = vsel %vm380, %v383, %v386
    %v388 = vsel %vm377, nan, %v387
    %v389 = vand.u32 2147483647, %v76
    %vm390 = vcmp.le.f32.partialorder %v389, 0.7853982
    %vm391 = vcmp.lt.s32.totalorder %v76, 0
    %v392 = vand.u32 %v76, 2139095040
    %v393 = vshrl.u32 %v392, 23
    %v394 = vsub.s32 %v393, 127
    %v395 = vand.u32 2147483647, %v76
    %v396 = vand.u32 %v395, 8388607
    %v397 = vor.u32 %v396, 8388608
    %v398 = vsub.s32 0, %v397
    %v399 = vadd.s32 %v394, 1
    %vm400 = vcmp.gt.s32.totalorder %v399, 0
    %v401 = vsel %vm400, %v399, 0
    %v402 = vshrl.u32 %v401, 5
    %v403 = vand.u32 %v401, 31
    %v404 = vsub.s32 32, %v403
    %v405 = vshrl.u32 683565275, %v404
    %v406 = vshll.u32 683565275, %v403
    %v407 = vshrl.u32 2475754826, %v404
    %v408 = vor.u32 %v406, %v407
    %v409 = vshll.u32 2475754826, %v403
    %v410 = vshrl.u32 2131351028, %v404
    %v411 = vor.u32 %v409, %v410
    %v412 = vshll.u32 2131351028, %v403
    %v413 = vshrl.u32 2102212464, %v404
    %v414 = vor.u32 %v412, %v413
    %v415 = vshll.u32 2102212464, %v403
    %v416 = vshrl.u32 920167782, %v404
    %v417 = vor.u32 %v415, %v416
    %v418 = vshll.u32 920167782, %v403
    %v419 = vshrl.u32 1326507024, %v404
    %v420 = vor.u32 %v418, %v419
    %vm421 = vcmp.lt.s32.totalorder %v402, 1
    %vm422 = vcmp.lt.s32.totalorder %v402, 2
    %vm423 = vcmp.lt.s32.totalorder %v402, 3
    %vm424 = vcmp.lt.s32.totalorder %v402, 4
    %v425 = vsel %vm421, %v405, %v408
    %v426 = vsel %vm424, %v414, 2102212464
    %v427 = vsel %vm423, %v411, %v426
    %v428 = vsel %vm422, %v425, %v427
    %v429 = vsel %vm421, %v408, %v411
    %v430 = vsel %vm424, %v417, 920167782
    %v431 = vsel %vm423, %v414, %v430
    %v432 = vsel %vm422, %v429, %v431
    %v433 = vsel %vm421, %v411, %v414
    %v434 = vsel %vm424, %v420, 1326507024
    %v435 = vsel %vm423, %v417, %v434
    %v436 = vsel %vm422, %v433, %v435
    %v437 = vshll.u32 %v397, 8
    %v438 = vmul.u32.u64.compose %v437, %v436
    %v439 = vextract.low.u32 %v438
    %v440 = vextract.high.u32 %v438
    %v441 = vmul.u32.u64.compose %v437, %v432
    %v442 = vextract.low.u32 %v441
    %v443 = vextract.high.u32 %v441
    %v444 = vmul.u32 %v437, %v428
    %v445 = vadd.s32 %v440, %v442
    %vm446 = vc.u32 %v440, %v442
    %v447 = vadd.s32 %v443, 1
    %v448 = vsel %vm446, %v447, %v443
    %v449 = vadd.s32 %v444, %v448
    %v450 = vadd.s32 %v449, 536870912
    %v451 = vshrl.u32 %v450, 30
    %v452 = vshll.u32 %v451, 30
    %v453 = vsub.s32 %v449, %v452
    %vm454 = vcmp.lt.s32.totalorder %v453, 0
    %v455 = vsub.s32 0, %v453
    %v456 = vsel %vm454, %v455, %v453
    %v457 = vclz %v456
    %v458 = vsub.s32 %v457, 2
    %vm459 = vcmp.gt.s32.totalorder 0, %v458
    %v460 = vsel %vm459, 0, %v458
    %v461 = vsub.s32 32, %v460
    %v462 = vshll.u32 %v453, %v460
    %v463 = vshrl.u32 %v445, %v461
    %v464 = vor.u32 %v462, %v463
    %v465 = vsub.s32 4294967266, %v460
    %v466 = vadd.s32 %v465, 127
    %v467 = vshll.u32 %v466, 23
    %v468 = vor.u32 4788187, %v467
    %v469 = vand.u32 2147483647, %v468
    %v471 = vcvt.s32.f32 %v464
    %v472 = vmul.f32 %v471, %v469
    %v473 = vxor.u32 %v472, 2147483648
    %v474 = vsel %vm391, %v473, %v472
    %v475 = vsub.s32 4, %v451
    %v476 = vsel %vm391, %v475, %v451
    %v477 = vsel %vm390, %v76, %v474
    %v478 = vsel %vm390, 0, %v476
    %v479 = vcosq.f32.pop %v477
    %v480 = vsinq.f32.pop %v477
    %vm481 = vweird.f32 %v76
    %v482 = vadd.s32 %v478, 3
    %v483 = vand.u32 %v482, 3
    %vm484 = vcmp.lt.s32.totalorder %v483, 2
    %vm485 = vcmp.eq.s32.totalorder %v483, 0
    %v486 = vxor.u32 %v480, 2147483648
    %v487 = vsel %vm485, %v479, %v486
    %vm488 = vcmp.eq.s32.totalorder %v483, 2
    %v489 = vxor.u32 %v479, 2147483648
    %v490 = vsel %vm488, %v489, %v480
    %v491 = vsel %vm484, %v487, %v490
    %v492 = vsel %vm481, nan, %v491
    %v493 = vand.u32 2147483647, %v73
    %vm494 = vcmp.le.f32.partialorder %v493, 0.7853982
    %vm495 = vcmp.lt.s32.totalorder %v73, 0
    %v496 = vand.u32 %v73, 2139095040
    %v497 = vshrl.u32 %v496, 23
    %v498 = vsub.s32 %v497, 127
    %v499 = vand.u32 2147483647, %v73
    %v500 = vand.u32 %v499, 8388607
    %v501 = vor.u32 %v500, 8388608
    %v502 = vsub.s32 0, %v501
    %v503 = vadd.s32 %v498, 1
    %vm504 = vcmp.gt.s32.totalorder %v503, 0
    %v505 = vsel %vm504, %v503, 0
    %v506 = vshrl.u32 %v505, 5
    %v507 = vand.u32 %v505, 31
    %v508 = vsub.s32 32, %v507
    %v509 = vshrl.u32 683565275, %v508
    %v510 = vshll.u32 683565275, %v507
    %v511 = vshrl.u32 2475754826, %v508
    %v512 = vor.u32 %v510, %v511
    %v513 = vshll.u32 2475754826, %v507
    %v514 = vshrl.u32 2131351028, %v508
    %v515 = vor.u32 %v513, %v514
    %v516 = vshll.u32 2131351028, %v507
    %v517 = vshrl.u32 2102212464, %v508
    %v518 = vor.u32 %v516, %v517
    %v519 = vshll.u32 2102212464, %v507
    %v520 = vshrl.u32 920167782, %v508
    %v521 = vor.u32 %v519, %v520
    %v522 = vshll.u32 920167782, %v507
    %v523 = vshrl.u32 1326507024, %v508
    %v524 = vor.u32 %v522, %v523
    %vm525 = vcmp.lt.s32.totalorder %v506, 1
    %vm526 = vcmp.lt.s32.totalorder %v506, 2
    %vm527 = vcmp.lt.s32.totalorder %v506, 3
    %vm528 = vcmp.lt.s32.totalorder %v506, 4
    %v529 = vsel %vm525, %v509, %v512
    %v530 = vsel %vm528, %v518, 2102212464
    %v531 = vsel %vm527, %v515, %v530
    %v532 = vsel %vm526, %v529, %v531
    %v533 = vsel %vm525, %v512, %v515
    %v534 = vsel %vm528, %v521, 920167782
    %v535 = vsel %vm527, %v518, %v534
    %v536 = vsel %vm526, %v533, %v535
    %v537 = vsel %vm525, %v515, %v518
    %v538 = vsel %vm528, %v524, 1326507024
    %v539 = vsel %vm527, %v521, %v538
    %v540 = vsel %vm526, %v537, %v539
    %v541 = vshll.u32 %v501, 8
    %v542 = vmul.u32.u64.compose %v541, %v540
    %v543 = vextract.low.u32 %v542
    %v544 = vextract.high.u32 %v542
    %v545 = vmul.u32.u64.compose %v541, %v536
    %v546 = vextract.low.u32 %v545
    %v547 = vextract.high.u32 %v545
    %v548 = vmul.u32 %v541, %v532
    %v549 = vadd.s32 %v544, %v546
    %vm550 = vc.u32 %v544, %v546
    %v551 = vadd.s32 %v547, 1
    %v552 = vsel %vm550, %v551, %v547
    %v553 = vadd.s32 %v548, %v552
    %v554 = vadd.s32 %v553, 536870912
    %v555 = vshrl.u32 %v554, 30
    %v556 = vshll.u32 %v555, 30
    %v557 = vsub.s32 %v553, %v556
    %vm558 = vcmp.lt.s32.totalorder %v557, 0
    %v559 = vsub.s32 0, %v557
    %v560 = vsel %vm558, %v559, %v557
    %v561 = vclz %v560
    %v562 = vsub.s32 %v561, 2
    %vm563 = vcmp.gt.s32.totalorder 0, %v562
    %v564 = vsel %vm563, 0, %v562
    %v565 = vsub.s32 32, %v564
    %v566 = vshll.u32 %v557, %v564
    %v567 = vshrl.u32 %v549, %v565
    %v568 = vor.u32 %v566, %v567
    %v569 = vsub.s32 4294967266, %v564
    %v570 = vadd.s32 %v569, 127
    %v571 = vshll.u32 %v570, 23
    %v572 = vor.u32 4788187, %v571
    %v573 = vand.u32 2147483647, %v572
    %v575 = vcvt.s32.f32 %v568
    %v576 = vmul.f32 %v575, %v573
    %v577 = vxor.u32 %v576, 2147483648
    %v578 = vsel %vm495, %v577, %v576
    %v579 = vsub.s32 4, %v555
    %v580 = vsel %vm495, %v579, %v555
    %v581 = vsel %vm494, %v73, %v578
    %v582 = vsel %vm494, 0, %v580
    %v583 = vcosq.f32.pop %v581
    %v584 = vsinq.f32.pop %v581
    %vm585 = vweird.f32 %v73
    %v586 = vand.u32 %v582, 3
    %vm587 = vcmp.lt.s32.totalorder %v586, 2
    %vm588 = vcmp.eq.s32.totalorder %v586, 0
    %v589 = vxor.u32 %v584, 2147483648
    %v590 = vsel %vm588, %v583, %v589
    %vm591 = vcmp.eq.s32.totalorder %v586, 2
    %v592 = vxor.u32 %v583, 2147483648
    %v593 = vsel %vm591, %v592, %v584
    %v594 = vsel %vm587, %v590, %v593
    %v595 = vsel %vm585, nan, %v594
    %v596 = vand.u32 2147483647, %v74
    %vm597 = vcmp.le.f32.partialorder %v596, 0.7853982
    %vm598 = vcmp.lt.s32.totalorder %v74, 0
    %v599 = vand.u32 %v74, 2139095040
    %v600 = vshrl.u32 %v599, 23
    %v601 = vsub.s32 %v600, 127
    %v602 = vand.u32 2147483647, %v74
    %v603 = vand.u32 %v602, 8388607
    %v604 = vor.u32 %v603, 8388608
    %v605 = vsub.s32 0, %v604
    %v606 = vadd.s32 %v601, 1
    %vm607 = vcmp.gt.s32.totalorder %v606, 0
    %v608 = vsel %vm607, %v606, 0
    %v609 = vshrl.u32 %v608, 5
    %v610 = vand.u32 %v608, 31
    %v611 = vsub.s32 32, %v610
    %v612 = vshrl.u32 683565275, %v611
    %v613 = vshll.u32 683565275, %v610
    %v614 = vshrl.u32 2475754826, %v611
    %v615 = vor.u32 %v613, %v614
    %v616 = vshll.u32 2475754826, %v610
    %v617 = vshrl.u32 2131351028, %v611
    %v618 = vor.u32 %v616, %v617
    %v619 = vshll.u32 2131351028, %v610
    %v620 = vshrl.u32 2102212464, %v611
    %v621 = vor.u32 %v619, %v620
    %v622 = vshll.u32 2102212464, %v610
    %v623 = vshrl.u32 920167782, %v611
    %v624 = vor.u32 %v622, %v623
    %v625 = vshll.u32 920167782, %v610
    %v626 = vshrl.u32 1326507024, %v611
    %v627 = vor.u32 %v625, %v626
    %vm628 = vcmp.lt.s32.totalorder %v609, 1
    %vm629 = vcmp.lt.s32.totalorder %v609, 2
    %vm630 = vcmp.lt.s32.totalorder %v609, 3
    %vm631 = vcmp.lt.s32.totalorder %v609, 4
    %v632 = vsel %vm628, %v612, %v615
    %v633 = vsel %vm631, %v621, 2102212464
    %v634 = vsel %vm630, %v618, %v633
    %v635 = vsel %vm629, %v632, %v634
    %v636 = vsel %vm628, %v615, %v618
    %v637 = vsel %vm631, %v624, 920167782
    %v638 = vsel %vm630, %v621, %v637
    %v639 = vsel %vm629, %v636, %v638
    %v640 = vsel %vm628, %v618, %v621
    %v641 = vsel %vm631, %v627, 1326507024
    %v642 = vsel %vm630, %v624, %v641
    %v643 = vsel %vm629, %v640, %v642
    %v644 = vshll.u32 %v604, 8
    %v645 = vmul.u32.u64.compose %v644, %v643
    %v646 = vextract.low.u32 %v645
    %v647 = vextract.high.u32 %v645
    %v648 = vmul.u32.u64.compose %v644, %v639
    %v649 = vextract.low.u32 %v648
    %v650 = vextract.high.u32 %v648
    %v651 = vmul.u32 %v644, %v635
    %v652 = vadd.s32 %v647, %v649
    %vm653 = vc.u32 %v647, %v649
    %v654 = vadd.s32 %v650, 1
    %v655 = vsel %vm653, %v654, %v650
    %v656 = vadd.s32 %v651, %v655
    %v657 = vadd.s32 %v656, 536870912
    %v658 = vshrl.u32 %v657, 30
    %v659 = vshll.u32 %v658, 30
    %v660 = vsub.s32 %v656, %v659
    %vm661 = vcmp.lt.s32.totalorder %v660, 0
    %v662 = vsub.s32 0, %v660
    %v663 = vsel %vm661, %v662, %v660
    %v664 = vclz %v663
    %v665 = vsub.s32 %v664, 2
    %vm666 = vcmp.gt.s32.totalorder 0, %v665
    %v667 = vsel %vm666, 0, %v665
    %v668 = vsub.s32 32, %v667
    %v669 = vshll.u32 %v660, %v667
    %v670 = vshrl.u32 %v652, %v668
    %v671 = vor.u32 %v669, %v670
    %v672 = vsub.s32 4294967266, %v667
    %v673 = vadd.s32 %v672, 127
    %v674 = vshll.u32 %v673, 23
    %v675 = vor.u32 4788187, %v674
    %v676 = vand.u32 2147483647, %v675
    %v678 = vcvt.s32.f32 %v671
    %v679 = vmul.f32 %v678, %v676
    %v680 = vxor.u32 %v679, 2147483648
    %v681 = vsel %vm598, %v680, %v679
    %v682 = vsub.s32 4, %v658
    %v683 = vsel %vm598, %v682, %v658
    %v684 = vsel %vm597, %v74, %v681
    %v685 = vsel %vm597, 0, %v683
    %v686 = vcosq.f32.pop %v684
    %v687 = vsinq.f32.pop %v684
    %vm688 = vweird.f32 %v74
    %v689 = vand.u32 %v685, 3
    %vm690 = vcmp.lt.s32.totalorder %v689, 2
    %vm691 = vcmp.eq.s32.totalorder %v689, 0
    %v692 = vxor.u32 %v687, 2147483648
    %v693 = vsel %vm691, %v686, %v692
    %vm694 = vcmp.eq.s32.totalorder %v689, 2
    %v695 = vxor.u32 %v686, 2147483648
    %v696 = vsel %vm694, %v695, %v687
    %v697 = vsel %vm690, %v693, %v696
    %v698 = vsel %vm688, nan, %v697
    %v699 = vand.u32 2147483647, %v75
    %vm700 = vcmp.le.f32.partialorder %v699, 0.7853982
    %vm701 = vcmp.lt.s32.totalorder %v75, 0
    %v702 = vand.u32 %v75, 2139095040
    %v703 = vshrl.u32 %v702, 23
    %v704 = vsub.s32 %v703, 127
    %v705 = vand.u32 2147483647, %v75
    %v706 = vand.u32 %v705, 8388607
    %v707 = vor.u32 %v706, 8388608
    %v708 = vsub.s32 0, %v707
    %v709 = vadd.s32 %v704, 1
    %vm710 = vcmp.gt.s32.totalorder %v709, 0
    %v711 = vsel %vm710, %v709, 0
    %v712 = vshrl.u32 %v711, 5
    %v713 = vand.u32 %v711, 31
    %v714 = vsub.s32 32, %v713
    %v715 = vshrl.u32 683565275, %v714
    %v716 = vshll.u32 683565275, %v713
    %v717 = vshrl.u32 2475754826, %v714
    %v718 = vor.u32 %v716, %v717
    %v719 = vshll.u32 2475754826, %v713
    %v720 = vshrl.u32 2131351028, %v714
    %v721 = vor.u32 %v719, %v720
    %v722 = vshll.u32 2131351028, %v713
    %v723 = vshrl.u32 2102212464, %v714
    %v724 = vor.u32 %v722, %v723
    %v725 = vshll.u32 2102212464, %v713
    %v726 = vshrl.u32 920167782, %v714
    %v727 = vor.u32 %v725, %v726
    %v728 = vshll.u32 920167782, %v713
    %v729 = vshrl.u32 1326507024, %v714
    %v730 = vor.u32 %v728, %v729
    %vm731 = vcmp.lt.s32.totalorder %v712, 1
    %vm732 = vcmp.lt.s32.totalorder %v712, 2
    %vm733 = vcmp.lt.s32.totalorder %v712, 3
    %vm734 = vcmp.lt.s32.totalorder %v712, 4
    %v735 = vsel %vm731, %v715, %v718
    %v736 = vsel %vm734, %v724, 2102212464
    %v737 = vsel %vm733, %v721, %v736
    %v738 = vsel %vm732, %v735, %v737
    %v739 = vsel %vm731, %v718, %v721
    %v740 = vsel %vm734, %v727, 920167782
    %v741 = vsel %vm733, %v724, %v740
    %v742 = vsel %vm732, %v739, %v741
    %v743 = vsel %vm731, %v721, %v724
    %v744 = vsel %vm734, %v730, 1326507024
    %v745 = vsel %vm733, %v727, %v744
    %v746 = vsel %vm732, %v743, %v745
    %v747 = vshll.u32 %v707, 8
    %v748 = vmul.u32.u64.compose %v747, %v746
    %v749 = vextract.low.u32 %v748
    %v750 = vextract.high.u32 %v748
    %v751 = vmul.u32.u64.compose %v747, %v742
    %v752 = vextract.low.u32 %v751
    %v753 = vextract.high.u32 %v751
    %v754 = vmul.u32 %v747, %v738
    %v755 = vadd.s32 %v750, %v752
    %vm756 = vc.u32 %v750, %v752
    %v757 = vadd.s32 %v753, 1
    %v758 = vsel %vm756, %v757, %v753
    %v759 = vadd.s32 %v754, %v758
    %v760 = vadd.s32 %v759, 536870912
    %v761 = vshrl.u32 %v760, 30
    %v762 = vshll.u32 %v761, 30
    %v763 = vsub.s32 %v759, %v762
    %vm764 = vcmp.lt.s32.totalorder %v763, 0
    %v765 = vsub.s32 0, %v763
    %v766 = vsel %vm764, %v765, %v763
    %v767 = vclz %v766
    %v768 = vsub.s32 %v767, 2
    %vm769 = vcmp.gt.s32.totalorder 0, %v768
    %v770 = vsel %vm769, 0, %v768
    %v771 = vsub.s32 32, %v770
    %v772 = vshll.u32 %v763, %v770
    %v773 = vshrl.u32 %v755, %v771
    %v774 = vor.u32 %v772, %v773
    %v775 = vsub.s32 4294967266, %v770
    %v776 = vadd.s32 %v775, 127
    %v777 = vshll.u32 %v776, 23
    %v778 = vor.u32 4788187, %v777
    %v779 = vand.u32 2147483647, %v778
    %v781 = vcvt.s32.f32 %v774
    %v782 = vmul.f32 %v781, %v779
    %v783 = vxor.u32 %v782, 2147483648
    %v784 = vsel %vm701, %v783, %v782
    %v785 = vsub.s32 4, %v761
    %v786 = vsel %vm701, %v785, %v761
    %v787 = vsel %vm700, %v75, %v784
    %v788 = vsel %vm700, 0, %v786
    %v789 = vcosq.f32.pop %v787
    %v790 = vsinq.f32.pop %v787
    %vm791 = vweird.f32 %v75
    %v792 = vand.u32 %v788, 3
    %vm793 = vcmp.lt.s32.totalorder %v792, 2
    %vm794 = vcmp.eq.s32.totalorder %v792, 0
    %v795 = vxor.u32 %v790, 2147483648
    %v796 = vsel %vm794, %v789, %v795
    %vm797 = vcmp.eq.s32.totalorder %v792, 2
    %v798 = vxor.u32 %v789, 2147483648
    %v799 = vsel %vm797, %v798, %v790
    %v800 = vsel %vm793, %v796, %v799
    %v801 = vsel %vm791, nan, %v800
    %v802 = vand.u32 2147483647, %v76
    %vm803 = vcmp.le.f32.partialorder %v802, 0.7853982
    %vm804 = vcmp.lt.s32.totalorder %v76, 0
    %v805 = vand.u32 %v76, 2139095040
    %v806 = vshrl.u32 %v805, 23
    %v807 = vsub.s32 %v806, 127
    %v808 = vand.u32 2147483647, %v76
    %v809 = vand.u32 %v808, 8388607
    %v810 = vor.u32 %v809, 8388608
    %v811 = vsub.s32 0, %v810
    %v812 = vadd.s32 %v807, 1
    %vm813 = vcmp.gt.s32.totalorder %v812, 0
    %v814 = vsel %vm813, %v812, 0
    %v815 = vshrl.u32 %v814, 5
    %v816 = vand.u32 %v814, 31
    %v817 = vsub.s32 32, %v816
    %v818 = vshrl.u32 683565275, %v817
    %v819 = vshll.u32 683565275, %v816
    %v820 = vshrl.u32 2475754826, %v817
    %v821 = vor.u32 %v819, %v820
    %v822 = vshll.u32 2475754826, %v816
    %v823 = vshrl.u32 2131351028, %v817
    %v824 = vor.u32 %v822, %v823
    %v825 = vshll.u32 2131351028, %v816
    %v826 = vshrl.u32 2102212464, %v817
    %v827 = vor.u32 %v825, %v826
    %v828 = vshll.u32 2102212464, %v816
    %v829 = vshrl.u32 920167782, %v817
    %v830 = vor.u32 %v828, %v829
    %v831 = vshll.u32 920167782, %v816
    %v832 = vshrl.u32 1326507024, %v817
    %v833 = vor.u32 %v831, %v832
    %vm834 = vcmp.lt.s32.totalorder %v815, 1
    %vm835 = vcmp.lt.s32.totalorder %v815, 2
    %vm836 = vcmp.lt.s32.totalorder %v815, 3
    %vm837 = vcmp.lt.s32.totalorder %v815, 4
    %v838 = vsel %vm834, %v818, %v821
    %v839 = vsel %vm837, %v827, 2102212464
    %v840 = vsel %vm836, %v824, %v839
    %v841 = vsel %vm835, %v838, %v840
    %v842 = vsel %vm834, %v821, %v824
    %v843 = vsel %vm837, %v830, 920167782
    %v844 = vsel %vm836, %v827, %v843
    %v845 = vsel %vm835, %v842, %v844
    %v846 = vsel %vm834, %v824, %v827
    %v847 = vsel %vm837, %v833, 1326507024
    %v848 = vsel %vm836, %v830, %v847
    %v849 = vsel %vm835, %v846, %v848
    %v850 = vshll.u32 %v810, 8
    %v851 = vmul.u32.u64.compose %v850, %v849
    %v852 = vextract.low.u32 %v851
    %v853 = vextract.high.u32 %v851
    %v854 = vmul.u32.u64.compose %v850, %v845
    %v855 = vextract.low.u32 %v854
    %v856 = vextract.high.u32 %v854
    %v857 = vmul.u32 %v850, %v841
    %v858 = vadd.s32 %v853, %v855
    %vm859 = vc.u32 %v853, %v855
    %v860 = vadd.s32 %v856, 1
    %v861 = vsel %vm859, %v860, %v856
    %v862 = vadd.s32 %v857, %v861
    %v863 = vadd.s32 %v862, 536870912
    %v864 = vshrl.u32 %v863, 30
    %v865 = vshll.u32 %v864, 30
    %v866 = vsub.s32 %v862, %v865
    %vm867 = vcmp.lt.s32.totalorder %v866, 0
    %v868 = vsub.s32 0, %v866
    %v869 = vsel %vm867, %v868, %v866
    %v870 = vclz %v869
    %v871 = vsub.s32 %v870, 2
    %vm872 = vcmp.gt.s32.totalorder 0, %v871
    %v873 = vsel %vm872, 0, %v871
    %v874 = vsub.s32 32, %v873
    %v875 = vshll.u32 %v866, %v873
    %v876 = vshrl.u32 %v858, %v874
    %v877 = vor.u32 %v875, %v876
    %v878 = vsub.s32 4294967266, %v873
    %v879 = vadd.s32 %v878, 127
    %v880 = vshll.u32 %v879, 23
    %v881 = vor.u32 4788187, %v880
    %v882 = vand.u32 2147483647, %v881
    %v884 = vcvt.s32.f32 %v877
    %v885 = vmul.f32 %v884, %v882
    %v886 = vxor.u32 %v885, 2147483648
    %v887 = vsel %vm804, %v886, %v885
    %v888 = vsub.s32 4, %v864
    %v889 = vsel %vm804, %v888, %v864
    %v890 = vsel %vm803, %v76, %v887
    %v891 = vsel %vm803, 0, %v889
    %v892 = vcosq.f32.pop %v890
    %v893 = vsinq.f32.pop %v890
    %vm894 = vweird.f32 %v76
    %v895 = vand.u32 %v891, 3
    %vm896 = vcmp.lt.s32.totalorder %v895, 2
    %vm897 = vcmp.eq.s32.totalorder %v895, 0
    %v898 = vxor.u32 %v893, 2147483648
    %v899 = vsel %vm897, %v892, %v898
    %vm900 = vcmp.eq.s32.totalorder %v895, 2
    %v901 = vxor.u32 %v892, 2147483648
    %v902 = vsel %vm900, %v901, %v893
    %v903 = vsel %vm896, %v899, %v902
    %v904 = vsel %vm894, nan, %v903
    %v905 = vld [vmem:[%s3] sm:$0xf]
    %v906 = vld [vmem:[%s2] sm:$0xff]
    %v907 = vld [vmem:[%s2 + $0x8] sm:$0xff]
    %909 = vset.pattern.permute.xlu0 0
    %910 = vperm.xlu0 %909, %v906
    %v911 = vpop.permute.xlu0 %910
    %914 = vset.pattern.permute.xlu0 0
    %915 = vperm.xlu0 %914, %v907
    %v916 = vpop.permute.xlu0 %915
    %v918 = vlaneseq
    %v919 = vshrl.u32 %v918, 7
    %v920 = vsub.s32 0, %v919
    %v921 = vrot.slane %v905, %v920
    %v922 = vmul.f32 %v911, %v921
    %v923 = vmul.f32 %v916, %v921
    %924 = vset.pattern.permute.xlu0 1
    %925 = vperm.xlu0 %924, %v906
    %v926 = vpop.permute.xlu0 %925
    %928 = vset.pattern.permute.xlu0 1
    %929 = vperm.xlu0 %928, %v907
    %v930 = vpop.permute.xlu0 %929
    %v932 = vlaneseq
    %v933 = vshrl.u32 %v932, 7
    %v934 = vsub.s32 1, %v933
    %v935 = vrot.slane %v905, %v934
    %v936 = vmul.f32 %v926, %v935
    %v937 = vmul.f32 %v930, %v935
    %v938 = vadd.f32 %v922, %v936
    %v939 = vadd.f32 %v923, %v937
    %940 = vset.pattern.permute.xlu0 2
    %941 = vperm.xlu0 %940, %v906
    %v942 = vpop.permute.xlu0 %941
    %944 = vset.pattern.permute.xlu0 2
    %945 = vperm.xlu0 %944, %v907
    %v946 = vpop.permute.xlu0 %945
    %v948 = vlaneseq
    %v949 = vshrl.u32 %v948, 7
    %v950 = vsub.s32 2, %v949
    %v951 = vrot.slane %v905, %v950
    %v952 = vmul.f32 %v942, %v951
    %v953 = vmul.f32 %v946, %v951
    %v954 = vadd.f32 %v938, %v952
    %v955 = vadd.f32 %v939, %v953
    %956 = vset.pattern.permute.xlu0 3
    %957 = vperm.xlu0 %956, %v906
    %v958 = vpop.permute.xlu0 %957
    %960 = vset.pattern.permute.xlu0 3
    %961 = vperm.xlu0 %960, %v907
    %v962 = vpop.permute.xlu0 %961
    %v964 = vlaneseq
    %v965 = vshrl.u32 %v964, 7
    %v966 = vsub.s32 3, %v965
    %v967 = vrot.slane %v905, %v966
    %v968 = vmul.f32 %v958, %v967
    %v969 = vmul.f32 %v962, %v967
    %v970 = vadd.f32 %v954, %v968
    %v971 = vadd.f32 %v955, %v969
    %v974 = vrot.slane %v970, 7
    %v975 = vrot.slane %v971, 7
    %vm978 = vcmask 1040384
    %v979 = vsel %vm978, 0.0, %v974
    %v980 = vsel %vm978, 0.0, %v975
    %985 = vrot.lane.b32.xlu0 %v595, 8
    %v986 = vpop.permute.xlu0 %985
    %987 = vrot.lane.b32.xlu0 %v698, 8
    %v988 = vpop.permute.xlu0 %987
    %989 = vrot.lane.b32.xlu0 %v801, 8
    %v990 = vpop.permute.xlu0 %989
    %991 = vrot.lane.b32.xlu0 %v904, 8
    %v992 = vpop.permute.xlu0 %991
    %999 = vrot.lane.b32.xlu0 %v979, 16
    %v1000 = vpop.permute.xlu0 %999
    %1001 = vrot.lane.b32.xlu0 %v974, 16
    %v1002 = vpop.permute.xlu0 %1001
    %1003 = vrot.lane.b32.xlu0 %v980, 16
    %v1004 = vpop.permute.xlu0 %1003
    %1005 = vrot.lane.b32.xlu0 %v975, 16
    %v1006 = vpop.permute.xlu0 %1005
    %vm1011 = vcmask 64512
    %v1012 = vsel %vm1011, %v180, %v986
    %v1013 = vsel %vm1011, %v284, %v988
    %v1014 = vsel %vm1011, %v388, %v990
    %v1015 = vsel %vm1011, %v492, %v992
    %vm1016 = vcmask 130048
    %v1017 = vsel %vm1016, %v1012, %v1000
    %v1018 = vsel %vm1016, %v1013, %v1002
    %v1019 = vsel %vm1016, %v1014, %v1004
    %v1020 = vsel %vm1016, %v1015, %v1006
    %vm1021 = vcmask 261120
    %1022 = vst.msk [vmem:[%s4] sm:$0xff] %vm1021, %v1017
    %vm1023 = vcmask 253952
    %1024 = vst.msk [vmem:[%s4 + $0x8] sm:$0x1] %vm1023, %v1018
    %1025 = vst.msk [vmem:[%s4 + $0x10] sm:$0xff] %vm1021, %v1019
    %1026 = vst.msk [vmem:[%s4 + $0x18] sm:$0x1] %vm1023, %v1020
    // Predicated region
    $region18: #{encoder_representations.1} parent=1 // pred_check
      _
    $region19: #{encoder_representations.1} parent=1 // pred_check_branch
      %1028 = sbr.rel (0) target = $region21
    $region20: #{encoder_representations.1} parent=1 // pred_region
      _
    $region21: #{encoder_representations.1} parent=1 // pred_fallthru
      _
    // Predicated region
    $region22: #{encoder_representations.1} parent=1 // pred_check
      _
    $region23: #{encoder_representations.1} parent=1 // pred_check_branch
      %1030 = sbr.rel (0) target = $region25
    $region24: #{encoder_representations.1} parent=1 // pred_region
      %s1032 = ssub.s32 32, 32
      %1033 = vsyncadd [#allocation3], %s1032
      %s1035 = sshll.u32 [#allocation2], 4
      %s1036 = int_to_ptr.vmem [resolvable:$true] %s1035
      %1038 = dma.vmem_to_hbm [thread:$0]  %s1036, 32, %s5, [#allocation3]
    $region25: #{encoder_representations.1} parent=1 // pred_fallthru
      _
    // Predicated region
    $region26: #{encoder_representations.1} parent=1 // pred_check
      _
    $region27: #{encoder_representations.1} parent=1 // pred_check_branch
      %1040 = sbr.rel (0) target = $region29
    $region28: #{encoder_representations.1} parent=1 // pred_region
      _
    $region29: #{encoder_representations.1} parent=1 // pred_fallthru
      _
    // Predicated region
    $region30: #{encoder_representations.1} parent=1 // pred_check
      _
    $region31: #{encoder_representations.1} parent=1 // pred_check_branch
      %1042 = sbr.rel (0) target = $region33
    $region32: #{encoder_representations.1} parent=1 // pred_region
      %1043 = dma.done [#allocation3], 32
    $region33: #{encoder_representations.1} parent=1 // pred_fallthru
      _
    %1044 = vsyncpa [#allocation3], 1

</llo_original>
